<compile_context>
chip_gen: v6e
topology: v6e:2x2x1
jax: 0.10.0
libtpu: 0.0.40
codegen_flags: <defaults>
</compile_context>

<pallas_src>
import functools

import jax
import jax.numpy as jnp
import numpy as np
from jax import lax
from jax.experimental import pallas as pl
from jax.experimental.pallas import tpu as pltpu


def _round_up(n, m):
    return ((n + m - 1) // m) * m


# ----------------------------------------------------------------------------
# Kernel.  Block refs:
#   x_ref, y_ref, o_ref : (block_batch, C_p, HW_p) f32
#   wl1_ref : (2, Ci_p, C_p)  bf16   local branches (0=local_att, 1=local_att2)
#   bl1_ref : (2, Ci_p, 1)    f32
#   wl2_ref : (2, C_p, Ci_p)  bf16
#   bl2_ref : (2, C_p, 1)     f32
#   wg1t_ref: (C_p, Ci_p)     f32    global_att layer-1 weights, transposed
#   bg1_ref : (1, Ci_p)       f32
#   wg2_ref : (C_p, Ci_p)     f32    global_att layer-2 weights
#   bg2_ref : (C_p, 1)        f32
# ----------------------------------------------------------------------------
def iaff_kernel(x_ref, y_ref, wl1_ref, bl1_ref, wl2_ref, bl2_ref,
                wg1t_ref, bg1_ref, wg2_ref, bg2_ref, o_ref, *, inv_hw):
    nb = x_ref.shape[0]  # static block_batch

    # Global-branch weights are tiny; load once per grid step.
    wg1t = wg1t_ref[...]
    bg1 = bg1_ref[...]
    wg2 = wg2_ref[...]
    bg2 = bg2_ref[...]

    def local_mlp(z, i):
        # (Ci,C) @ (C,HW): lane-dense MXU matmul, bf16 operands, f32 accumulate.
        h = jnp.dot(wl1_ref[i], z.astype(jnp.bfloat16),
                    preferred_element_type=jnp.float32) + bl1_ref[i]
        h = jnp.maximum(h, 0.0)  # ReLU
        return jnp.dot(wl2_ref[i], h.astype(jnp.bfloat16),
                       preferred_element_type=jnp.float32) + bl2_ref[i]

    def global_mlp(gap_col):
        # gap_col: (C,1) f32.  2-layer MLP on the VPU/XLU — avoids 1-lane MXU ops.
        h = jnp.sum(wg1t * gap_col, axis=0, keepdims=True) + bg1   # (1, Ci)
        h = jnp.maximum(h, 0.0)
        return jnp.sum(wg2 * h, axis=1, keepdims=True) + bg2       # (C, 1)

    def body(b, carry):
        x = x_ref[b]      # (C_p, HW_p)
        y = y_ref[b]
        d = x - y         # reused by both gates: x*w + y*(1-w) == y + d*w
        xa = x + y

        # ---- stage 1 ----
        xl = local_mlp(xa, 0)                                  # local_att
        gap = jnp.sum(xa, axis=-1, keepdims=True) * inv_hw     # GAP (true HW)
        xg = global_mlp(gap)                                   # global_att
        wei = jax.nn.sigmoid(xl + xg)
        xi = y + d * wei

        # ---- stage 2 ----
        xl2 = local_mlp(xi, 1)                                 # local_att2
        gap2 = jnp.sum(xi, axis=-1, keepdims=True) * inv_hw
        xg2 = global_mlp(gap2)        # NOTE: global_att reused (PyTorch quirk)
        wei2 = jax.nn.sigmoid(xl2 + xg2)
        o_ref[b] = y + d * wei2
        return carry

    # fori_loop (not a static unroll) bounds live temporaries to one element.
    lax.fori_loop(0, nb, body, 0)


# ----------------------------------------------------------------------------
# Sizing helpers.
# ----------------------------------------------------------------------------
def _vmem_budget_bytes():
    cap = 64 * 1024 * 1024  # conservative fallback == v7x physical VMEM
    try:
        info = pltpu.get_tpu_info()
        cap = int(getattr(info, "vmem_capacity_bytes", cap))
    except Exception:
        pass
    # ~3/4 of physical, capped: ~48 MiB on v7x, ~96 MiB on v5e/v6e.
    return int(min((cap * 3) // 4, 100 * 1024 * 1024))


def _choose_block_batch(N, C_p, HW_p, vmem_budget):
    slab = C_p * HW_p * 4                      # one (C, HW) f32 plane
    # Target ~4 MiB combined per-step HBM traffic (x + y + out).
    bb_traffic = max(1, (4 * 1024 * 1024) // (3 * slab))
    # Double-buffered x/y/out blocks (6*bb*slab) must fit under the budget,
    # leaving room for ~a dozen per-iteration slab temporaries + weights.
    usable = max(vmem_budget - 16 * slab - (4 << 20), 6 * slab)
    bb_vmem = max(1, usable // (6 * slab))
    bb = max(1, min(bb_traffic, bb_vmem, N))
    if N >= 2:                                 # >=2 grid steps: pipelining +
        bb = min(bb, max(1, N // 2))           # both TensorCores on v7x
    while N % bb:                              # must divide N evenly
        bb -= 1
    return bb


# ----------------------------------------------------------------------------
# pallas_call wrapper (operates on padded (N, C_p, HW_p) f32 arrays).
# ----------------------------------------------------------------------------
def iaff_pallas(x, y, params, *, hw_true, block_batch=None):
    wl1, bl1, wl2, bl2, wg1t, bg1, wg2, bg2 = params
    N, C_p, HW_p = x.shape

    vmem_budget = _vmem_budget_bytes()
    if block_batch is None:
        block_batch = _choose_block_batch(N, C_p, HW_p, vmem_budget)
    assert N % block_batch == 0

    grid = (N // block_batch,)
    data_spec = pl.BlockSpec((block_batch, C_p, HW_p), lambda n: (n, 0, 0))

    def const_spec(arr):
        nd = arr.ndim
        return pl.BlockSpec(arr.shape, lambda n, _nd=nd: (0,) * _nd)

    kernel = functools.partial(iaff_kernel, inv_hw=1.0 / float(hw_true))

    return pl.pallas_call(
        kernel,
        out_shape=jax.ShapeDtypeStruct((N, C_p, HW_p), jnp.float32),
        grid=grid,
        in_specs=[
            data_spec, data_spec,
            const_spec(wl1), const_spec(bl1),
            const_spec(wl2), const_spec(bl2),
            const_spec(wg1t), const_spec(bg1),
            const_spec(wg2), const_spec(bg2),
        ],
        out_specs=data_spec,
        compiler_params=pltpu.CompilerParams(
            dimension_semantics=("parallel",),
            vmem_limit_bytes=vmem_budget,
        ),
    )(x, y, wl1, bl1, wl2, bl2, wg1t, bg1, wg2, bg2)


# ----------------------------------------------------------------------------
# Parameter construction: 1x1 conv + BatchNorm (eval mode) folded per branch.
# Local branches (local_att, local_att2) are stored bf16 in MXU layout; the
# global branch (global_att) is stored f32 in VPU layout (layer-1 transposed).
# global_att2 exists in the module but is never used by forward — not built.
# ----------------------------------------------------------------------------
def _make_branch_params(key, C, Ci, eps=1e-5):
    ks = jax.random.split(key, 12)
    W1 = jax.random.normal(ks[0], (Ci, C), jnp.float32) * 0.3
    c1 = jax.random.normal(ks[1], (Ci,), jnp.float32) * 0.1
    g1 = 1.0 + 0.1 * jax.random.normal(ks[2], (Ci,), jnp.float32)
    be1 = 0.1 * jax.random.normal(ks[3], (Ci,), jnp.float32)
    m1 = 0.1 * jax.random.normal(ks[4], (Ci,), jnp.float32)
    v1 = 0.5 + jax.random.uniform(ks[5], (Ci,), jnp.float32)
    W2 = jax.random.normal(ks[6], (C, Ci), jnp.float32) * 0.3
    c2 = jax.random.normal(ks[7], (C,), jnp.float32) * 0.1
    g2 = 1.0 + 0.1 * jax.random.normal(ks[8], (C,), jnp.float32)
    be2 = 0.1 * jax.random.normal(ks[9], (C,), jnp.float32)
    m2 = 0.1 * jax.random.normal(ks[10], (C,), jnp.float32)
    v2 = 0.5 + jax.random.uniform(ks[11], (C,), jnp.float32)

    s1 = g1 / jnp.sqrt(v1 + eps)
    W1e = W1 * s1[:, None]
    b1e = (c1 - m1) * s1 + be1
    s2 = g2 / jnp.sqrt(v2 + eps)
    W2e = W2 * s2[:, None]
    b2e = (c2 - m2) * s2 + be2
    return W1e, b1e, W2e, b2e


def make_iaff_params(key, channels, r=4):
    C = channels
    Ci = max(1, int(C // r))
    C_p = _round_up(C, 8)
    Ci_p = _round_up(Ci, 8)

    keys = jax.random.split(key, 4)
    # branch order matches the module: local_att, global_att, local_att2
    br = [_make_branch_params(keys[i], C, Ci) for i in range(3)]

    def padw(w, rr, cc):
        return jnp.pad(w, ((0, rr - w.shape[0]), (0, cc - w.shape[1])))

    def padv(v, nn):
        return jnp.pad(v, (0, nn - v.shape[0]))

    loc = [br[0], br[2]]  # local_att, local_att2
    wl1 = jnp.stack([padw(b[0], Ci_p, C_p) for b in loc]).astype(jnp.bfloat16)
    bl1 = jnp.stack([padv(b[1], Ci_p) for b in loc])[:, :, None]
    wl2 = jnp.stack([padw(b[2], C_p, Ci_p) for b in loc]).astype(jnp.bfloat16)
    bl2 = jnp.stack([padv(b[3], C_p) for b in loc])[:, :, None]

    g = br[1]  # global_att (f32, VPU layout)
    wg1t = padw(g[0], Ci_p, C_p).T          # (C_p, Ci_p)
    bg1 = padv(g[1], Ci_p)[None, :]         # (1, Ci_p)
    wg2 = padw(g[2], C_p, Ci_p)             # (C_p, Ci_p)
    bg2 = padv(g[3], C_p)[:, None]          # (C_p, 1)

    return (wl1, bl1, wl2, bl2, wg1t, bg1, wg2, bg2)


# ----------------------------------------------------------------------------
# Pure-JAX reference mirroring the kernel numerics (same padded params/layout).
# ----------------------------------------------------------------------------
def iaff_reference(x, y, params, *, inv_hw):
    wl1, bl1, wl2, bl2, wg1t, bg1, wg2, bg2 = params

    def local_mlp(z, i):
        h = jnp.einsum("oc,ncl->nol", wl1[i], z.astype(jnp.bfloat16),
                       preferred_element_type=jnp.float32) + bl1[i]
        h = jnp.maximum(h, 0.0)
        return jnp.einsum("oc,ncl->nol", wl2[i], h.astype(jnp.bfloat16),
                          preferred_element_type=jnp.float32) + bl2[i]

    def global_mlp(gap):  # gap: (n, C_p, 1)
        h = jnp.sum(wg1t[None] * gap, axis=1, keepdims=True) + bg1[None]
        h = jnp.maximum(h, 0.0)
        return jnp.sum(wg2[None] * h, axis=2, keepdims=True) + bg2[None]

    d = x - y
    xa = x + y
    xl = local_mlp(xa, 0)
    gap = jnp.sum(xa, axis=-1, keepdims=True) * inv_hw
    wei = jax.nn.sigmoid(xl + global_mlp(gap))
    xi = y + d * wei
    xl2 = local_mlp(xi, 1)
    gap2 = jnp.sum(xi, axis=-1, keepdims=True) * inv_hw
    wei2 = jax.nn.sigmoid(xl2 + global_mlp(gap2))
    return y + d * wei2


# ----------------------------------------------------------------------------
# Public wrapper: NCHW in -> NCHW out.  Only reshape + zero-pad (C -> x8,
# HW -> x128) so every block is lane-dense; padding is sliced off at the end.
# ----------------------------------------------------------------------------
def _flatten_and_pad(x_nchw):
    N, C, H, W = x_nchw.shape
    HW = H * W
    C_p, HW_p = _round_up(C, 8), _round_up(HW, 128)
    x = x_nchw.reshape(N, C, HW)
    if (C_p, HW_p) != (C, HW):
        x = jnp.pad(x, ((0, 0), (0, C_p - C), (0, HW_p - HW)))
    return x


@jax.jit
def iaff_forward(x_nchw, y_nchw, params):
    N, C, H, W = x_nchw.shape
    HW = H * W
    x_f = _flatten_and_pad(x_nchw)
    y_f = _flatten_and_pad(y_nchw)
    o_f = iaff_pallas(x_f, y_f, params, hw_true=HW)
    return o_f[:, :C, :HW].reshape(N, C, H, W)


if __name__ == "__main__":
    N, C, H, W = 2, 8, 16, 16
    r = 4

    key = jax.random.PRNGKey(0)
    kx, ky, kp = jax.random.split(key, 3)
    x = jax.random.normal(kx, (N, C, H, W), jnp.float32)
    y = jax.random.normal(ky, (N, C, H, W), jnp.float32)

    params = make_iaff_params(kp, C, r)

    out = iaff_forward(x, y, params)
    out = jax.block_until_ready(out)
    assert out.shape == (N, C, H, W)

    # Sanity check against a pure-JAX reference using the same padded params.
    xp = _flatten_and_pad(x)
    yp = _flatten_and_pad(y)
    ref_p = iaff_reference(xp, yp, params, inv_hw=1.0 / (H * W))
    ref = ref_p[:, :C, :H * W].reshape(N, C, H, W)

    np.testing.assert_allclose(np.asarray(out), np.asarray(ref),
                               rtol=1e-2, atol=1e-2)

    print("KERNEL_OK")
</pallas_src>

<mosaic_0001>
module attributes {stable_mosaic.version = 11 : i64} {
  func.func @iaff_kernel(%arg0: i32, %arg1: memref<1x8x256xf32, #tpu.memory_space<vmem>>, %arg2: memref<1x8x256xf32, #tpu.memory_space<vmem>>, %arg3: memref<2x8x8xbf16, #tpu.memory_space<vmem>>, %arg4: memref<2x8x1xf32, #tpu.memory_space<vmem>>, %arg5: memref<2x8x8xbf16, #tpu.memory_space<vmem>>, %arg6: memref<2x8x1xf32, #tpu.memory_space<vmem>>, %arg7: memref<8x8xf32, #tpu.memory_space<vmem>>, %arg8: memref<1x8xf32, #tpu.memory_space<vmem>>, %arg9: memref<8x8xf32, #tpu.memory_space<vmem>>, %arg10: memref<8x1xf32, #tpu.memory_space<vmem>>, %arg11: memref<1x8x256xf32, #tpu.memory_space<vmem>>) attributes {dimension_semantics = [#tpu.dimension_semantics<parallel>], iteration_bounds = array<i64: 2>, scalar_prefetch = 0 : i64, scratch_operands = 0 : i64, tpu.core_type = #tpu.core_type<tc>, window_params = [{transform_indices = @transform_0, window_bounds = array<i64: 1, 8, 256>}, {transform_indices = @transform_1, window_bounds = array<i64: 1, 8, 256>}, {pipeline_mode = #tpu.pipeline_mode<synchronous>, transform_indices = @transform_2, window_bounds = array<i64: 2, 8, 8>}, {pipeline_mode = #tpu.pipeline_mode<synchronous>, transform_indices = @transform_3, window_bounds = array<i64: 2, 8, 1>}, {pipeline_mode = #tpu.pipeline_mode<synchronous>, transform_indices = @transform_4, window_bounds = array<i64: 2, 8, 8>}, {pipeline_mode = #tpu.pipeline_mode<synchronous>, transform_indices = @transform_5, window_bounds = array<i64: 2, 8, 1>}, {pipeline_mode = #tpu.pipeline_mode<synchronous>, transform_indices = @transform_6, window_bounds = array<i64: 8, 8>}, {pipeline_mode = #tpu.pipeline_mode<synchronous>, transform_indices = @transform_7, window_bounds = array<i64: 1, 8>}, {pipeline_mode = #tpu.pipeline_mode<synchronous>, transform_indices = @transform_8, window_bounds = array<i64: 8, 8>}, {pipeline_mode = #tpu.pipeline_mode<synchronous>, transform_indices = @transform_9, window_bounds = array<i64: 8, 1>}, {transform_indices = @transform_10, window_bounds = array<i64: 1, 8, 256>}]} {
    %c0 = arith.constant 0 : index
    %c0_0 = arith.constant 0 : index
    %0 = vector.load %arg7[%c0, %c0_0] : memref<8x8xf32, #tpu.memory_space<vmem>>, vector<8x8xf32>
    %c0_1 = arith.constant 0 : index
    %c0_2 = arith.constant 0 : index
    %1 = vector.load %arg8[%c0_1, %c0_2] : memref<1x8xf32, #tpu.memory_space<vmem>>, vector<1x8xf32>
    %c0_3 = arith.constant 0 : index
    %c0_4 = arith.constant 0 : index
    %2 = vector.load %arg9[%c0_3, %c0_4] : memref<8x8xf32, #tpu.memory_space<vmem>>, vector<8x8xf32>
    %c0_5 = arith.constant 0 : index
    %c0_6 = arith.constant 0 : index
    %3 = vector.load %arg10[%c0_5, %c0_6] : memref<8x1xf32, #tpu.memory_space<vmem>>, vector<8x1xf32>
    %c0_i32 = arith.constant 0 : i32
    %4 = arith.index_cast %c0_i32 : i32 to index
    %c0_7 = arith.constant 0 : index
    %c0_8 = arith.constant 0 : index
    %5 = vector.load %arg1[%4, %c0_7, %c0_8] : memref<1x8x256xf32, #tpu.memory_space<vmem>>, vector<1x8x256xf32>
    %6 = vector.shape_cast %5 : vector<1x8x256xf32> to vector<8x256xf32>
    %7 = arith.index_cast %c0_i32 : i32 to index
    %c0_9 = arith.constant 0 : index
    %c0_10 = arith.constant 0 : index
    %8 = vector.load %arg2[%7, %c0_9, %c0_10] : memref<1x8x256xf32, #tpu.memory_space<vmem>>, vector<1x8x256xf32>
    %9 = vector.shape_cast %8 : vector<1x8x256xf32> to vector<8x256xf32>
    %10 = arith.subf %6, %9 : vector<8x256xf32>
    %11 = arith.addf %6, %9 : vector<8x256xf32>
    %c0_11 = arith.constant 0 : index
    %c0_12 = arith.constant 0 : index
    %c0_13 = arith.constant 0 : index
    %12 = vector.load %arg3[%c0_11, %c0_12, %c0_13] : memref<2x8x8xbf16, #tpu.memory_space<vmem>>, vector<1x8x8xbf16>
    %13 = vector.shape_cast %12 : vector<1x8x8xbf16> to vector<8x8xbf16>
    %14 = arith.truncf %11 : vector<8x256xf32> to vector<8x256xbf16>
    %cst = arith.constant dense<0.000000e+00> : vector<8x256xf32>
    %15 = tpu.matmul %13, %14, %cst {dimension_numbers = #tpu.dot_dimension_numbers<[1], [0], [0], [1], [0, 0, 1, 1], [], []>} : vector<8x8xbf16>, vector<8x256xbf16>, vector<8x256xf32> -> vector<8x256xf32>
    %c0_14 = arith.constant 0 : index
    %c0_15 = arith.constant 0 : index
    %c0_16 = arith.constant 0 : index
    %16 = vector.load %arg4[%c0_14, %c0_15, %c0_16] : memref<2x8x1xf32, #tpu.memory_space<vmem>>, vector<1x8x1xf32>
    %17 = vector.shape_cast %16 : vector<1x8x1xf32> to vector<8x1xf32>
    %18 = vector.broadcast %17 : vector<8x1xf32> to vector<8x256xf32>
    %19 = arith.addf %15, %18 : vector<8x256xf32>
    %cst_17 = arith.constant 0.000000e+00 : f32
    %20 = vector.broadcast %cst_17 : f32 to vector<8x256xf32>
    %21 = arith.maximumf %19, %20 : vector<8x256xf32>
    %c0_18 = arith.constant 0 : index
    %c0_19 = arith.constant 0 : index
    %c0_20 = arith.constant 0 : index
    %22 = vector.load %arg5[%c0_18, %c0_19, %c0_20] : memref<2x8x8xbf16, #tpu.memory_space<vmem>>, vector<1x8x8xbf16>
    %23 = vector.shape_cast %22 : vector<1x8x8xbf16> to vector<8x8xbf16>
    %24 = arith.truncf %21 : vector<8x256xf32> to vector<8x256xbf16>
    %cst_21 = arith.constant dense<0.000000e+00> : vector<8x256xf32>
    %25 = tpu.matmul %23, %24, %cst_21 {dimension_numbers = #tpu.dot_dimension_numbers<[1], [0], [0], [1], [0, 0, 1, 1], [], []>} : vector<8x8xbf16>, vector<8x256xbf16>, vector<8x256xf32> -> vector<8x256xf32>
    %c0_22 = arith.constant 0 : index
    %c0_23 = arith.constant 0 : index
    %c0_24 = arith.constant 0 : index
    %26 = vector.load %arg6[%c0_22, %c0_23, %c0_24] : memref<2x8x1xf32, #tpu.memory_space<vmem>>, vector<1x8x1xf32>
    %27 = vector.shape_cast %26 : vector<1x8x1xf32> to vector<8x1xf32>
    %28 = vector.broadcast %27 : vector<8x1xf32> to vector<8x256xf32>
    %29 = arith.addf %25, %28 : vector<8x256xf32>
    %cst_25 = arith.constant dense<0.000000e+00> : vector<8xf32>
    %30 = vector.multi_reduction <add>, %11, %cst_25 [1] : vector<8x256xf32> to vector<8xf32>
    %31 = vector.shape_cast %30 : vector<8xf32> to vector<8x1xf32>
    %cst_26 = arith.constant 3.906250e-03 : f32
    %32 = vector.broadcast %cst_26 : f32 to vector<8x1xf32>
    %33 = arith.mulf %31, %32 : vector<8x1xf32>
    %34 = vector.broadcast %33 : vector<8x1xf32> to vector<8x8xf32>
    %35 = arith.mulf %0, %34 : vector<8x8xf32>
    %cst_27 = arith.constant dense<0.000000e+00> : vector<8xf32>
    %36 = vector.multi_reduction <add>, %35, %cst_27 [0] : vector<8x8xf32> to vector<8xf32>
    %37 = vector.shape_cast %36 : vector<8xf32> to vector<1x8xf32>
    %38 = arith.addf %37, %1 : vector<1x8xf32>
    %cst_28 = arith.constant 0.000000e+00 : f32
    %39 = vector.broadcast %cst_28 : f32 to vector<1x8xf32>
    %40 = arith.maximumf %38, %39 : vector<1x8xf32>
    %41 = vector.broadcast %40 : vector<1x8xf32> to vector<8x8xf32>
    %42 = arith.mulf %2, %41 : vector<8x8xf32>
    %cst_29 = arith.constant dense<0.000000e+00> : vector<8xf32>
    %43 = vector.multi_reduction <add>, %42, %cst_29 [1] : vector<8x8xf32> to vector<8xf32>
    %44 = vector.shape_cast %43 : vector<8xf32> to vector<8x1xf32>
    %45 = arith.addf %44, %3 : vector<8x1xf32>
    %46 = vector.broadcast %45 : vector<8x1xf32> to vector<8x256xf32>
    %47 = arith.addf %29, %46 : vector<8x256xf32>
    %48 = arith.negf %47 : vector<8x256xf32>
    %49 = math.exp %48 : vector<8x256xf32>
    %cst_30 = arith.constant 1.000000e+00 : f32
    %50 = vector.broadcast %cst_30 : f32 to vector<8x256xf32>
    %51 = arith.addf %50, %49 : vector<8x256xf32>
    %52 = arith.divf %50, %51 : vector<8x256xf32>
    %53 = arith.mulf %10, %52 : vector<8x256xf32>
    %54 = arith.addf %9, %53 : vector<8x256xf32>
    %c1 = arith.constant 1 : index
    %c0_31 = arith.constant 0 : index
    %c0_32 = arith.constant 0 : index
    %55 = vector.load %arg3[%c1, %c0_31, %c0_32] : memref<2x8x8xbf16, #tpu.memory_space<vmem>>, vector<1x8x8xbf16>
    %56 = vector.shape_cast %55 : vector<1x8x8xbf16> to vector<8x8xbf16>
    %57 = arith.truncf %54 : vector<8x256xf32> to vector<8x256xbf16>
    %cst_33 = arith.constant dense<0.000000e+00> : vector<8x256xf32>
    %58 = tpu.matmul %56, %57, %cst_33 {dimension_numbers = #tpu.dot_dimension_numbers<[1], [0], [0], [1], [0, 0, 1, 1], [], []>} : vector<8x8xbf16>, vector<8x256xbf16>, vector<8x256xf32> -> vector<8x256xf32>
    %c1_34 = arith.constant 1 : index
    %c0_35 = arith.constant 0 : index
    %c0_36 = arith.constant 0 : index
    %59 = vector.load %arg4[%c1_34, %c0_35, %c0_36] : memref<2x8x1xf32, #tpu.memory_space<vmem>>, vector<1x8x1xf32>
    %60 = vector.shape_cast %59 : vector<1x8x1xf32> to vector<8x1xf32>
    %61 = vector.broadcast %60 : vector<8x1xf32> to vector<8x256xf32>
    %62 = arith.addf %58, %61 : vector<8x256xf32>
    %cst_37 = arith.constant 0.000000e+00 : f32
    %63 = vector.broadcast %cst_37 : f32 to vector<8x256xf32>
    %64 = arith.maximumf %62, %63 : vector<8x256xf32>
    %c1_38 = arith.constant 1 : index
    %c0_39 = arith.constant 0 : index
    %c0_40 = arith.constant 0 : index
    %65 = vector.load %arg5[%c1_38, %c0_39, %c0_40] : memref<2x8x8xbf16, #tpu.memory_space<vmem>>, vector<1x8x8xbf16>
    %66 = vector.shape_cast %65 : vector<1x8x8xbf16> to vector<8x8xbf16>
    %67 = arith.truncf %64 : vector<8x256xf32> to vector<8x256xbf16>
    %cst_41 = arith.constant dense<0.000000e+00> : vector<8x256xf32>
    %68 = tpu.matmul %66, %67, %cst_41 {dimension_numbers = #tpu.dot_dimension_numbers<[1], [0], [0], [1], [0, 0, 1, 1], [], []>} : vector<8x8xbf16>, vector<8x256xbf16>, vector<8x256xf32> -> vector<8x256xf32>
    %c1_42 = arith.constant 1 : index
    %c0_43 = arith.constant 0 : index
    %c0_44 = arith.constant 0 : index
    %69 = vector.load %arg6[%c1_42, %c0_43, %c0_44] : memref<2x8x1xf32, #tpu.memory_space<vmem>>, vector<1x8x1xf32>
    %70 = vector.shape_cast %69 : vector<1x8x1xf32> to vector<8x1xf32>
    %71 = vector.broadcast %70 : vector<8x1xf32> to vector<8x256xf32>
    %72 = arith.addf %68, %71 : vector<8x256xf32>
    %cst_45 = arith.constant dense<0.000000e+00> : vector<8xf32>
    %73 = vector.multi_reduction <add>, %54, %cst_45 [1] : vector<8x256xf32> to vector<8xf32>
    %74 = vector.shape_cast %73 : vector<8xf32> to vector<8x1xf32>
    %cst_46 = arith.constant 3.906250e-03 : f32
    %75 = vector.broadcast %cst_46 : f32 to vector<8x1xf32>
    %76 = arith.mulf %74, %75 : vector<8x1xf32>
    %77 = vector.broadcast %76 : vector<8x1xf32> to vector<8x8xf32>
    %78 = arith.mulf %0, %77 : vector<8x8xf32>
    %cst_47 = arith.constant dense<0.000000e+00> : vector<8xf32>
    %79 = vector.multi_reduction <add>, %78, %cst_47 [0] : vector<8x8xf32> to vector<8xf32>
    %80 = vector.shape_cast %79 : vector<8xf32> to vector<1x8xf32>
    %81 = arith.addf %80, %1 : vector<1x8xf32>
    %cst_48 = arith.constant 0.000000e+00 : f32
    %82 = vector.broadcast %cst_48 : f32 to vector<1x8xf32>
    %83 = arith.maximumf %81, %82 : vector<1x8xf32>
    %84 = vector.broadcast %83 : vector<1x8xf32> to vector<8x8xf32>
    %85 = arith.mulf %2, %84 : vector<8x8xf32>
    %cst_49 = arith.constant dense<0.000000e+00> : vector<8xf32>
    %86 = vector.multi_reduction <add>, %85, %cst_49 [1] : vector<8x8xf32> to vector<8xf32>
    %87 = vector.shape_cast %86 : vector<8xf32> to vector<8x1xf32>
    %88 = arith.addf %87, %3 : vector<8x1xf32>
    %89 = vector.broadcast %88 : vector<8x1xf32> to vector<8x256xf32>
    %90 = arith.addf %72, %89 : vector<8x256xf32>
    %91 = arith.negf %90 : vector<8x256xf32>
    %92 = math.exp %91 : vector<8x256xf32>
    %cst_50 = arith.constant 1.000000e+00 : f32
    %93 = vector.broadcast %cst_50 : f32 to vector<8x256xf32>
    %94 = arith.addf %93, %92 : vector<8x256xf32>
    %95 = arith.divf %93, %94 : vector<8x256xf32>
    %96 = arith.mulf %10, %95 : vector<8x256xf32>
    %97 = arith.addf %9, %96 : vector<8x256xf32>
    %98 = arith.index_cast %c0_i32 : i32 to index
    %c0_51 = arith.constant 0 : index
    %c0_52 = arith.constant 0 : index
    %99 = vector.load %arg11[%98, %c0_51, %c0_52] : memref<1x8x256xf32, #tpu.memory_space<vmem>>, vector<1x8x256xf32>
    %100 = vector.shape_cast %99 : vector<1x8x256xf32> to vector<8x256xf32>
    %101 = vector.shape_cast %97 : vector<8x256xf32> to vector<1x8x256xf32>
    tpu.vector_store %arg11[%98, %c0_51, %c0_52], %101 {strides = array<i32>} : memref<1x8x256xf32, #tpu.memory_space<vmem>>, vector<1x8x256xf32>,
    %c1_i32 = arith.constant 1 : i32
    return
  }
  func.func @transform_0(%arg0: i32) -> (i32, i32, i32) {
    %c0_i32 = arith.constant 0 : i32
    %c0_i32_0 = arith.constant 0 : i32
    %c0_i32_1 = arith.constant 0 : i32
    return %arg0, %c0_i32, %c0_i32_0 : i32, i32, i32
  }
  func.func @transform_1(%arg0: i32) -> (i32, i32, i32) {
    %c0_i32 = arith.constant 0 : i32
    %c0_i32_0 = arith.constant 0 : i32
    %c0_i32_1 = arith.constant 0 : i32
    return %arg0, %c0_i32, %c0_i32_0 : i32, i32, i32
  }
  func.func @transform_2(%arg0: i32) -> (i32, i32, i32) {
    %c0_i32 = arith.constant 0 : i32
    %c0_i32_0 = arith.constant 0 : i32
    %c0_i32_1 = arith.constant 0 : i32
    %c0_i32_2 = arith.constant 0 : i32
    return %c0_i32, %c0_i32_0, %c0_i32_1 : i32, i32, i32
  }
  func.func @transform_3(%arg0: i32) -> (i32, i32, i32) {
    %c0_i32 = arith.constant 0 : i32
    %c0_i32_0 = arith.constant 0 : i32
    %c0_i32_1 = arith.constant 0 : i32
    %c0_i32_2 = arith.constant 0 : i32
    return %c0_i32, %c0_i32_0, %c0_i32_1 : i32, i32, i32
  }
  func.func @transform_4(%arg0: i32) -> (i32, i32, i32) {
    %c0_i32 = arith.constant 0 : i32
    %c0_i32_0 = arith.constant 0 : i32
    %c0_i32_1 = arith.constant 0 : i32
    %c0_i32_2 = arith.constant 0 : i32
    return %c0_i32, %c0_i32_0, %c0_i32_1 : i32, i32, i32
  }
  func.func @transform_5(%arg0: i32) -> (i32, i32, i32) {
    %c0_i32 = arith.constant 0 : i32
    %c0_i32_0 = arith.constant 0 : i32
    %c0_i32_1 = arith.constant 0 : i32
    %c0_i32_2 = arith.constant 0 : i32
    return %c0_i32, %c0_i32_0, %c0_i32_1 : i32, i32, i32
  }
  func.func @transform_6(%arg0: i32) -> (i32, i32) {
    %c0_i32 = arith.constant 0 : i32
    %c0_i32_0 = arith.constant 0 : i32
    %c0_i32_1 = arith.constant 0 : i32
    return %c0_i32, %c0_i32_0 : i32, i32
  }
  func.func @transform_7(%arg0: i32) -> (i32, i32) {
    %c0_i32 = arith.constant 0 : i32
    %c0_i32_0 = arith.constant 0 : i32
    %c0_i32_1 = arith.constant 0 : i32
    return %c0_i32, %c0_i32_0 : i32, i32
  }
  func.func @transform_8(%arg0: i32) -> (i32, i32) {
    %c0_i32 = arith.constant 0 : i32
    %c0_i32_0 = arith.constant 0 : i32
    %c0_i32_1 = arith.constant 0 : i32
    return %c0_i32, %c0_i32_0 : i32, i32
  }
  func.func @transform_9(%arg0: i32) -> (i32, i32) {
    %c0_i32 = arith.constant 0 : i32
    %c0_i32_0 = arith.constant 0 : i32
    %c0_i32_1 = arith.constant 0 : i32
    return %c0_i32, %c0_i32_0 : i32, i32
  }
  func.func @transform_10(%arg0: i32) -> (i32, i32, i32) {
    %c0_i32 = arith.constant 0 : i32
    %c0_i32_0 = arith.constant 0 : i32
    %c0_i32_1 = arith.constant 0 : i32
    return %arg0, %c0_i32, %c0_i32_0 : i32, i32, i32
  }
}

</mosaic_0001>

<llo_original>
// kernel: iaff_forward.1
$region0: #{iaff_forward.1}
  #allocation0 [shape = 'u32[]', space=smem, size = 0x4, offset = 0x4, fixed_abs, tag = 'smem constant byte address 0x4 - core index']
  #allocation1 [shape = 'u32[144,128]{1,0:T(1,128)}', space=vmem, size = 0x12000, scoped, tag = 'internal scratch']
  %s0 = inlined_call_operand.vmem [shape: f32[2,8,256], index: 0, kind: input, shape index: {}]
  %s1 = inlined_call_operand.vmem [shape: f32[2,8,256], index: 1, kind: input, shape index: {}]
  %s2 = inlined_call_operand.vmem [shape: bf16[2,8,8], index: 2, kind: input, shape index: {}]
  %s3 = inlined_call_operand.vmem [shape: f32[2,8,1], index: 3, kind: input, shape index: {}]
  %s4 = inlined_call_operand.vmem [shape: bf16[2,8,8], index: 4, kind: input, shape index: {}]
  %s5 = inlined_call_operand.vmem [shape: f32[2,8,1], index: 5, kind: input, shape index: {}]
  %s6 = inlined_call_operand.vmem [shape: f32[8,8], index: 6, kind: input, shape index: {}]
  %s7 = inlined_call_operand.vmem [shape: f32[1,8], index: 7, kind: input, shape index: {}]
  %s8 = inlined_call_operand.vmem [shape: f32[8,8], index: 8, kind: input, shape index: {}]
  %s9 = inlined_call_operand.vmem [shape: f32[8,1], index: 9, kind: input, shape index: {}]
  %s10 = inlined_call_operand.vmem [shape: f32[2,8,256], index: 10, kind: output, shape index: {}]
  %s11 = sld [smem:[#allocation0]]
  $region73: #{iaff_forward.1} parent=0
    _
  %s13 = ssub.s32 1, %s11
  %s14 = scalar_select 0, %s13, %s11
  loop: start=0, step=1, limit=4
  $region2: #{iaff_forward.1} parent=0 // loop_pre_header
    _
  $region3: #{iaff_forward.1} parent=0 // loop_header
    %s16 = sphi 0, %s20
    %p17 = scmp.ge.s32.totalorder %s16, 4
    %s26 = sphi 0, %s28
    %s29 = sphi 0, %s26
    %s30 = sphi 0, %s29
    %s46 = sphi 0, %s30
    %s52 = sphi 0, %s54
    %s55 = sphi 0, %s52
    %s56 = sphi 0, %s55
    %s72 = sphi 0, %s56
    %s76 = sphi 0, %s76
    %s78 = sphi 0, %s76
    %s79 = sphi 0, %s78
    %s93 = sphi 0, %s79
    %s97 = sphi 0, %s97
    %s99 = sphi 0, %s97
    %s100 = sphi 0, %s99
    %s114 = sphi 0, %s100
    %s118 = sphi 0, %s118
    %s120 = sphi 0, %s118
    %s121 = sphi 0, %s120
    %s135 = sphi 0, %s121
    %s139 = sphi 0, %s139
    %s141 = sphi 0, %s139
    %s142 = sphi 0, %s141
    %s156 = sphi 0, %s142
    %s160 = sphi 0, %s160
    %s162 = sphi 0, %s160
    %s163 = sphi 0, %s162
    %s177 = sphi 0, %s163
    %s181 = sphi 0, %s181
    %s183 = sphi 0, %s181
    %s184 = sphi 0, %s183
    %s198 = sphi 0, %s184
    %s202 = sphi 0, %s202
    %s204 = sphi 0, %s202
    %s205 = sphi 0, %s204
    %s219 = sphi 0, %s205
    %s223 = sphi 0, %s223
    %s225 = sphi 0, %s223
    %s226 = sphi 0, %s225
    %s240 = sphi 0, %s226
    %s246 = sphi 0, %s248
    %s249 = sphi 0, %s246
    %s250 = sphi 0, %s249
    %s266 = sphi 0, %s250
  $region4: #{iaff_forward.1} parent=0 // loop_header_branch
    %19 = sbr.rel (%p17) target = $region8
  $region5: #{iaff_forward.1} parent=0 // loop_body
    %s21 = ssub.s32 %s16, 1
    %s22 = ssub.s32 %s16, 2
    %s23 = sadd.s32 %s16, 1
    %s24 = ssub.s32 %s16, %s23
    %p25 = scmp.eq.s32.totalorder %s24, 0
    %s27 = sadd.s32 %s26, 1
    %s28 = scalar_select %p25, %s26, %s27
    %p31 = pneg %p25
    %p32 = scmp.eq.s32.totalorder %s16, 1
    %p33 = por %p31, %p32
    %p34 = scmp.ne.s32.totalorder %s26, %s29
    %p35 = scmp.eq.s32.totalorder %s16, 0
    %p36 = por %p34, %p35
    %p37 = scmp.ne.s32.totalorder %s26, %s29
    %p38 = scmp.eq.s32.totalorder %s21, 1
    %p39 = por %p37, %p38
    %p40 = scmp.ne.s32.totalorder %s29, %s30
    %p41 = scmp.eq.s32.totalorder %s21, 0
    %p42 = por %p40, %p41
    %p43 = scmp.ne.s32.totalorder %s29, %s30
    %p44 = scmp.eq.s32.totalorder %s22, 1
    %p45 = por %p43, %p44
    %p47 = scmp.ne.s32.totalorder %s30, %s46
    %p48 = scmp.eq.s32.totalorder %s22, 0
    %p49 = por %p47, %p48
    %s50 = ssub.s32 %s16, %s23
    %p51 = scmp.eq.s32.totalorder %s50, 0
    %s53 = sadd.s32 %s52, 1
    %s54 = scalar_select %p51, %s52, %s53
    %p57 = pneg %p51
    %p58 = scmp.eq.s32.totalorder %s16, 1
    %p59 = por %p57, %p58
    %p60 = scmp.ne.s32.totalorder %s52, %s55
    %p61 = scmp.eq.s32.totalorder %s16, 0
    %p62 = por %p60, %p61
    %p63 = scmp.ne.s32.totalorder %s52, %s55
    %p64 = scmp.eq.s32.totalorder %s21, 1
    %p65 = por %p63, %p64
    %p66 = scmp.ne.s32.totalorder %s55, %s56
    %p67 = scmp.eq.s32.totalorder %s21, 0
    %p68 = por %p66, %p67
    %p69 = scmp.ne.s32.totalorder %s55, %s56
    %p70 = scmp.eq.s32.totalorder %s22, 1
    %p71 = por %p69, %p70
    %p73 = scmp.ne.s32.totalorder %s56, %s72
    %p74 = scmp.eq.s32.totalorder %s22, 0
    %p75 = por %p73, %p74
    %s77 = sadd.s32 %s76, 1
    %p80 = scmp.eq.s32.totalorder %s16, 1
    %p81 = scmp.ne.s32.totalorder %s76, %s78
    %p82 = scmp.eq.s32.totalorder %s16, 0
    %p83 = por %p81, %p82
    %p84 = scmp.ne.s32.totalorder %s76, %s78
    %p85 = scmp.eq.s32.totalorder %s21, 1
    %p86 = por %p84, %p85
    %p87 = scmp.ne.s32.totalorder %s78, %s79
    %p88 = scmp.eq.s32.totalorder %s21, 0
    %p89 = por %p87, %p88
    %p90 = scmp.ne.s32.totalorder %s78, %s79
    %p91 = scmp.eq.s32.totalorder %s22, 1
    %p92 = por %p90, %p91
    %p94 = scmp.ne.s32.totalorder %s79, %s93
    %p95 = scmp.eq.s32.totalorder %s22, 0
    %p96 = por %p94, %p95
    %s98 = sadd.s32 %s97, 1
    %p101 = scmp.eq.s32.totalorder %s16, 1
    %p102 = scmp.ne.s32.totalorder %s97, %s99
    %p103 = scmp.eq.s32.totalorder %s16, 0
    %p104 = por %p102, %p103
    %p105 = scmp.ne.s32.totalorder %s97, %s99
    %p106 = scmp.eq.s32.totalorder %s21, 1
    %p107 = por %p105, %p106
    %p108 = scmp.ne.s32.totalorder %s99, %s100
    %p109 = scmp.eq.s32.totalorder %s21, 0
    %p110 = por %p108, %p109
    %p111 = scmp.ne.s32.totalorder %s99, %s100
    %p112 = scmp.eq.s32.totalorder %s22, 1
    %p113 = por %p111, %p112
    %p115 = scmp.ne.s32.totalorder %s100, %s114
    %p116 = scmp.eq.s32.totalorder %s22, 0
    %p117 = por %p115, %p116
    %s119 = sadd.s32 %s118, 1
    %p122 = scmp.eq.s32.totalorder %s16, 1
    %p123 = scmp.ne.s32.totalorder %s118, %s120
    %p124 = scmp.eq.s32.totalorder %s16, 0
    %p125 = por %p123, %p124
    %p126 = scmp.ne.s32.totalorder %s118, %s120
    %p127 = scmp.eq.s32.totalorder %s21, 1
    %p128 = por %p126, %p127
    %p129 = scmp.ne.s32.totalorder %s120, %s121
    %p130 = scmp.eq.s32.totalorder %s21, 0
    %p131 = por %p129, %p130
    %p132 = scmp.ne.s32.totalorder %s120, %s121
    %p133 = scmp.eq.s32.totalorder %s22, 1
    %p134 = por %p132, %p133
    %p136 = scmp.ne.s32.totalorder %s121, %s135
    %p137 = scmp.eq.s32.totalorder %s22, 0
    %p138 = por %p136, %p137
    %s140 = sadd.s32 %s139, 1
    %p143 = scmp.eq.s32.totalorder %s16, 1
    %p144 = scmp.ne.s32.totalorder %s139, %s141
    %p145 = scmp.eq.s32.totalorder %s16, 0
    %p146 = por %p144, %p145
    %p147 = scmp.ne.s32.totalorder %s139, %s141
    %p148 = scmp.eq.s32.totalorder %s21, 1
    %p149 = por %p147, %p148
    %p150 = scmp.ne.s32.totalorder %s141, %s142
    %p151 = scmp.eq.s32.totalorder %s21, 0
    %p152 = por %p150, %p151
    %p153 = scmp.ne.s32.totalorder %s141, %s142
    %p154 = scmp.eq.s32.totalorder %s22, 1
    %p155 = por %p153, %p154
    %p157 = scmp.ne.s32.totalorder %s142, %s156
    %p158 = scmp.eq.s32.totalorder %s22, 0
    %p159 = por %p157, %p158
    %s161 = sadd.s32 %s160, 1
    %p164 = scmp.eq.s32.totalorder %s16, 1
    %p165 = scmp.ne.s32.totalorder %s160, %s162
    %p166 = scmp.eq.s32.totalorder %s16, 0
    %p167 = por %p165, %p166
    %p168 = scmp.ne.s32.totalorder %s160, %s162
    %p169 = scmp.eq.s32.totalorder %s21, 1
    %p170 = por %p168, %p169
    %p171 = scmp.ne.s32.totalorder %s162, %s163
    %p172 = scmp.eq.s32.totalorder %s21, 0
    %p173 = por %p171, %p172
    %p174 = scmp.ne.s32.totalorder %s162, %s163
    %p175 = scmp.eq.s32.totalorder %s22, 1
    %p176 = por %p174, %p175
    %p178 = scmp.ne.s32.totalorder %s163, %s177
    %p179 = scmp.eq.s32.totalorder %s22, 0
    %p180 = por %p178, %p179
    %s182 = sadd.s32 %s181, 1
    %p185 = scmp.eq.s32.totalorder %s16, 1
    %p186 = scmp.ne.s32.totalorder %s181, %s183
    %p187 = scmp.eq.s32.totalorder %s16, 0
    %p188 = por %p186, %p187
    %p189 = scmp.ne.s32.totalorder %s181, %s183
    %p190 = scmp.eq.s32.totalorder %s21, 1
    %p191 = por %p189, %p190
    %p192 = scmp.ne.s32.totalorder %s183, %s184
    %p193 = scmp.eq.s32.totalorder %s21, 0
    %p194 = por %p192, %p193
    %p195 = scmp.ne.s32.totalorder %s183, %s184
    %p196 = scmp.eq.s32.totalorder %s22, 1
    %p197 = por %p195, %p196
    %p199 = scmp.ne.s32.totalorder %s184, %s198
    %p200 = scmp.eq.s32.totalorder %s22, 0
    %p201 = por %p199, %p200
    %s203 = sadd.s32 %s202, 1
    %p206 = scmp.eq.s32.totalorder %s16, 1
    %p207 = scmp.ne.s32.totalorder %s202, %s204
    %p208 = scmp.eq.s32.totalorder %s16, 0
    %p209 = por %p207, %p208
    %p210 = scmp.ne.s32.totalorder %s202, %s204
    %p211 = scmp.eq.s32.totalorder %s21, 1
    %p212 = por %p210, %p211
    %p213 = scmp.ne.s32.totalorder %s204, %s205
    %p214 = scmp.eq.s32.totalorder %s21, 0
    %p215 = por %p213, %p214
    %p216 = scmp.ne.s32.totalorder %s204, %s205
    %p217 = scmp.eq.s32.totalorder %s22, 1
    %p218 = por %p216, %p217
    %p220 = scmp.ne.s32.totalorder %s205, %s219
    %p221 = scmp.eq.s32.totalorder %s22, 0
    %p222 = por %p220, %p221
    %s224 = sadd.s32 %s223, 1
    %p227 = scmp.eq.s32.totalorder %s16, 1
    %p228 = scmp.ne.s32.totalorder %s223, %s225
    %p229 = scmp.eq.s32.totalorder %s16, 0
    %p230 = por %p228, %p229
    %p231 = scmp.ne.s32.totalorder %s223, %s225
    %p232 = scmp.eq.s32.totalorder %s21, 1
    %p233 = por %p231, %p232
    %p234 = scmp.ne.s32.totalorder %s225, %s226
    %p235 = scmp.eq.s32.totalorder %s21, 0
    %p236 = por %p234, %p235
    %p237 = scmp.ne.s32.totalorder %s225, %s226
    %p238 = scmp.eq.s32.totalorder %s22, 1
    %p239 = por %p237, %p238
    %p241 = scmp.ne.s32.totalorder %s226, %s240
    %p242 = scmp.eq.s32.totalorder %s22, 0
    %p243 = por %p241, %p242
    %s244 = ssub.s32 %s16, %s23
    %p245 = scmp.eq.s32.totalorder %s244, 0
    %s247 = sadd.s32 %s246, 1
    %s248 = scalar_select %p245, %s246, %s247
    %p251 = pneg %p245
    %p252 = scmp.eq.s32.totalorder %s16, 1
    %p253 = por %p251, %p252
    %p254 = scmp.ne.s32.totalorder %s246, %s249
    %p255 = scmp.eq.s32.totalorder %s16, 0
    %p256 = por %p254, %p255
    %p257 = scmp.ne.s32.totalorder %s246, %s249
    %p258 = scmp.eq.s32.totalorder %s21, 1
    %p259 = por %p257, %p258
    %p260 = scmp.ne.s32.totalorder %s249, %s250
    %p261 = scmp.eq.s32.totalorder %s21, 0
    %p262 = por %p260, %p261
    %p263 = scmp.ne.s32.totalorder %s249, %s250
    %p264 = scmp.eq.s32.totalorder %s22, 1
    %p265 = por %p263, %p264
    %p267 = scmp.ne.s32.totalorder %s250, %s266
    %p268 = scmp.eq.s32.totalorder %s22, 0
    %p269 = por %p267, %p268
    %p270 = scmp.le.s32.totalorder 1, %s16
    %p271 = scmp.lt.s32.totalorder %s16, 3
    %p272 = pnand %p270, %p271
    %p273 = pneg %p272
    // Predicated region
    $region9: #{iaff_forward.1} parent=5 // pred_check
      _
    $region10: #{iaff_forward.1} parent=5 // pred_check_branch
      %275 = sbr.rel (%p272) target = $region12
    $region11: #{iaff_forward.1} parent=5 // pred_region
      %s276 = ssub.s32 %s16, 1
      // Predicated region
      $region13: #{iaff_forward.1} parent=11 // pred_check
        %p277 = pneg %p89
      $region14: #{iaff_forward.1} parent=11 // pred_check_branch
        %279 = sbr.rel (%p277) target = $region16
      $region15: #{iaff_forward.1} parent=11 // pred_region
        _
      $region16: #{iaff_forward.1} parent=11 // pred_fallthru
        _
      // Predicated region
      $region17: #{iaff_forward.1} parent=11 // pred_check
        %p280 = pneg %p110
      $region18: #{iaff_forward.1} parent=11 // pred_check_branch
        %282 = sbr.rel (%p280) target = $region20
      $region19: #{iaff_forward.1} parent=11 // pred_region
        _
      $region20: #{iaff_forward.1} parent=11 // pred_fallthru
        _
      // Predicated region
      $region21: #{iaff_forward.1} parent=11 // pred_check
        %p283 = pneg %p131
      $region22: #{iaff_forward.1} parent=11 // pred_check_branch
        %285 = sbr.rel (%p283) target = $region24
      $region23: #{iaff_forward.1} parent=11 // pred_region
        _
      $region24: #{iaff_forward.1} parent=11 // pred_fallthru
        _
      // Predicated region
      $region25: #{iaff_forward.1} parent=11 // pred_check
        %p286 = pneg %p152
      $region26: #{iaff_forward.1} parent=11 // pred_check_branch
        %288 = sbr.rel (%p286) target = $region28
      $region27: #{iaff_forward.1} parent=11 // pred_region
        _
      $region28: #{iaff_forward.1} parent=11 // pred_fallthru
        _
      // Predicated region
      $region29: #{iaff_forward.1} parent=11 // pred_check
        %p289 = pneg %p173
      $region30: #{iaff_forward.1} parent=11 // pred_check_branch
        %291 = sbr.rel (%p289) target = $region32
      $region31: #{iaff_forward.1} parent=11 // pred_region
        _
      $region32: #{iaff_forward.1} parent=11 // pred_fallthru
        _
      // Predicated region
      $region33: #{iaff_forward.1} parent=11 // pred_check
        %p292 = pneg %p194
      $region34: #{iaff_forward.1} parent=11 // pred_check_branch
        %294 = sbr.rel (%p292) target = $region36
      $region35: #{iaff_forward.1} parent=11 // pred_region
        _
      $region36: #{iaff_forward.1} parent=11 // pred_fallthru
        _
      // Predicated region
      $region37: #{iaff_forward.1} parent=11 // pred_check
        %p295 = pneg %p215
      $region38: #{iaff_forward.1} parent=11 // pred_check_branch
        %297 = sbr.rel (%p295) target = $region40
      $region39: #{iaff_forward.1} parent=11 // pred_region
        _
      $region40: #{iaff_forward.1} parent=11 // pred_fallthru
        _
      // Predicated region
      $region41: #{iaff_forward.1} parent=11 // pred_check
        %p298 = pneg %p236
      $region42: #{iaff_forward.1} parent=11 // pred_check_branch
        %300 = sbr.rel (%p298) target = $region44
      $region43: #{iaff_forward.1} parent=11 // pred_region
        _
      $region44: #{iaff_forward.1} parent=11 // pred_fallthru
        _
    $region12: #{iaff_forward.1} parent=5 // pred_fallthru
      _
    %p301 = scmp.lt.s32.totalorder %s16, 2
    // Predicated region
    $region45: #{iaff_forward.1} parent=5 // pred_check
      %p302 = pneg %p301
    $region46: #{iaff_forward.1} parent=5 // pred_check_branch
      %304 = sbr.rel (%p302) target = $region48
    $region47: #{iaff_forward.1} parent=5 // pred_region
      // Predicated region
      $region49: #{iaff_forward.1} parent=47 // pred_check
        %p305 = pneg %p36
      $region50: #{iaff_forward.1} parent=47 // pred_check_branch
        %307 = sbr.rel (%p305) target = $region52
      $region51: #{iaff_forward.1} parent=47 // pred_region
        %p308 = scmp.lt.s32.totalorder %s16, 1
        %s309 = scalar_select %p308, %s16, 1
        %s310 = smul.addr %s309, 2
        %s311 = smul.addr %s310, 8
        %s312 = scalar_lea.vmem %s0, %s311
      $region52: #{iaff_forward.1} parent=47 // pred_fallthru
        _
      // Predicated region
      $region53: #{iaff_forward.1} parent=47 // pred_check
        %p313 = pneg %p62
      $region54: #{iaff_forward.1} parent=47 // pred_check_branch
        %315 = sbr.rel (%p313) target = $region56
      $region55: #{iaff_forward.1} parent=47 // pred_region
        %p316 = scmp.lt.s32.totalorder %s16, 1
        %s317 = scalar_select %p316, %s16, 1
        %s318 = smul.addr %s317, 2
        %s319 = smul.addr %s318, 8
        %s320 = scalar_lea.vmem %s1, %s319
      $region56: #{iaff_forward.1} parent=47 // pred_fallthru
        _
    $region48: #{iaff_forward.1} parent=5 // pred_fallthru
      _
    %p321 = scmp.le.s32.totalorder 1, %s16
    %p322 = scmp.lt.s32.totalorder %s16, 3
    %p323 = pnand %p321, %p322
    %p324 = pneg %p323
    // Predicated region
    $region57: #{iaff_forward.1} parent=5 // pred_check
      _
    $region58: #{iaff_forward.1} parent=5 // pred_check_branch
      %326 = sbr.rel (%p323) target = $region60
    $region59: #{iaff_forward.1} parent=5 // pred_region
      %s327 = ssub.s32 %s16, 1
      %p328 = scmp.lt.s32.totalorder %s21, 1
      %s329 = scalar_select %p328, %s21, 1
      %s330 = smul.addr %s329, 2
      %s331 = smul.addr %s330, 8
      %s332 = scalar_lea.vmem %s0, %s331
      %p333 = pneg %p42
      %p334 = pneg %p39
      %p335 = scmp.lt.s32.totalorder %s21, 1
      %s336 = scalar_select %p335, %s21, 1
      %s337 = smul.addr %s336, 2
      %s338 = smul.addr %s337, 8
      %s339 = scalar_lea.vmem %s1, %s338
      %p340 = pneg %p68
      %p341 = pneg %p65
      %p342 = pneg %p89
      %p343 = pneg %p86
      %p344 = pneg %p110
      %p345 = pneg %p107
      %p346 = pneg %p131
      %p347 = pneg %p128
      %p348 = pneg %p152
      %p349 = pneg %p149
      %p350 = pneg %p173
      %p351 = pneg %p170
      %p352 = pneg %p194
      %p353 = pneg %p191
      %p354 = pneg %p215
      %p355 = pneg %p212
      %p356 = pneg %p236
      %p357 = pneg %p233
      %p358 = pneg %p262
      %p359 = pneg %p259
      %p360 = scmp.lt.s32.totalorder %s21, 1
      %s361 = scalar_select %p360, %s21, 1
      %s362 = smul.addr %s361, 2
      %s363 = smul.addr %s362, 8
      %s364 = scalar_lea.vmem %s10, %s363
      %p365 = scmp.lt.s32.totalorder %s21, 1
      %s366 = scalar_select %p365, %s21, 1
      %s367 = smul.addr %s366, 2
      %s368 = smul.addr %s367, 8
      %s369 = scalar_lea.vmem %s0, %s368
      %p370 = scmp.lt.s32.totalorder %s21, 1
      %s371 = scalar_select %p370, %s21, 1
      %s372 = smul.addr %s371, 2
      %s373 = smul.addr %s372, 8
      %s374 = scalar_lea.vmem %s1, %s373
      %p375 = scmp.lt.s32.totalorder %s21, 1
      %s376 = scalar_select %p375, %s21, 1
      %s377 = smul.addr %s376, 2
      %s378 = smul.addr %s377, 8
      %s379 = scalar_lea.vmem %s10, %s378
      %v381 = vld [vmem:[%s6] sm:$0xff]
      %v382 = vld [vmem:[%s7] sm:$0x1]
      %v383 = vld [vmem:[%s8] sm:$0xff]
      %v384 = vld [vmem:[%s9] sm:$0xff]
      %v385 = vld [vmem:[%s369] sm:$0xff]
      %v386 = vld [vmem:[%s369 + $0x8] sm:$0xff]
      %v387 = vld [vmem:[%s374] sm:$0xff]
      %v388 = vld [vmem:[%s374 + $0x8] sm:$0xff]
      %v389 = vsub.f32 %v385, %v387
      %v390 = vsub.f32 %v386, %v388
      %v391 = vadd.f32 %v385, %v387
      %v392 = vadd.f32 %v386, %v388
      %v393 = vld [vmem:[%s2] sm:$0xf]
      %v394 = vpack.c.bf16 %v391, %v391
      %v395 = vpack.c.bf16 %v392, %v392
      %v396 = vld [vmem:[%s3] sm:$0xff]
      %398 = vset.pattern.permute.xlu0 0
      %399 = vperm.xlu0 %398, %v396
      %v400 = vpop.permute.xlu0 %399
      %vm402 = vcmask 64512
      %v404 = vsel %vm402, %v393, 0
      %vm406 = vcmask 1043456
      %v408 = vsel %vm406, %v394, 0
      %v411 = vsel %vm406, %v395, 0
      %413 = vmatprep.subr.bf16.mxu0 0
      %414 = vmatpush1.bf16.msra.mxu0 0
      %415 = vmatprep.subr.bf16.mxu0 0
      %416 = vmatpush1.bf16.msra.mxu0 0
      %417 = vmatprep.subr.bf16.mxu0 0
      %418 = vmatpush1.bf16.msra.mxu0 0
      %419 = vmatprep.subr.bf16.mxu0 0
      %420 = vmatpush1.bf16.msra.mxu0 0
      %421 = vmatprep.subr.bf16.mxu0 0
      %422 = vmatpush1.bf16.msra.mxu0 0
      %423 = vmatprep.subr.bf16.mxu0 0
      %424 = vmatpush1.bf16.msra.mxu0 0
      %425 = vmatprep.subr.bf16.mxu0 0
      %426 = vmatpush1.bf16.msra.mxu0 0
      %427 = vmatprep.subr.bf16.mxu0 %v411
      %428 = vmatpush1.bf16.msra.mxu0 %v408
      %429 = vmatprep.subr.bf16.mxu0 0
      %430 = vmatpush2.bf16.msra.mxu0 0
      %431 = vmatprep.subr.bf16.mxu0 0
      %432 = vmatpush2.bf16.msra.mxu0 0
      %433 = vmatprep.subr.bf16.mxu0 0
      %434 = vmatpush2.bf16.msra.mxu0 0
      %435 = vmatprep.subr.bf16.mxu0 0
      %436 = vmatpush2.bf16.msra.mxu0 0
      %437 = vmatprep.subr.bf16.mxu0 0
      %438 = vmatpush2.bf16.msra.mxu0 0
      %439 = vmatprep.subr.bf16.mxu0 0
      %440 = vmatpush2.bf16.msra.mxu0 0
      %441 = vmatprep.subr.bf16.mxu0 0
      %442 = vmatpush2.bf16.msra.mxu0 0
      %443 = vmatprep.subr.bf16.mxu0 0
      %444 = vmatpush2.bf16.msra.mxu0 0
      %445 = vmatprep.mubr.bf16.mxu0 0
      %446 = vmatmul.mubr.bf16.gmra.mxu0 %v404
      %v447 = vpop.f32.mrf.mxu0
      %v448 = vadd.f32 %v400, %v447
      %v449 = vpop.f32.mrf.mxu0
      %v450 = vadd.f32 %v400, %v449
      %v451 = vpop.f32.mrf.mxu0
      %v452 = vpop.f32.mrf.mxu0
      %453 = vdwg.mxu0
      %v454 = vmax.f32 %v448, 0.0
      %v455 = vmax.f32 %v450, 0.0
      %v456 = vld [vmem:[%s4] sm:$0xf]
      %v457 = vpack.c.bf16 %v454, %v454
      %v458 = vpack.c.bf16 %v455, %v455
      %v459 = vld [vmem:[%s5] sm:$0xff]
      %461 = vset.pattern.permute.xlu0 0
      %462 = vperm.xlu0 %461, %v459
      %v463 = vpop.permute.xlu0 %462
      %v466 = vsel %vm402, %v456, 0
      %v469 = vsel %vm406, %v457, 0
      %v472 = vsel %vm406, %v458, 0
      %474 = vmatprep.subr.bf16.mxu0 0
      %475 = vmatpush1.bf16.msra.mxu0 0
      %476 = vmatprep.subr.bf16.mxu0 0
      %477 = vmatpush1.bf16.msra.mxu0 0
      %478 = vmatprep.subr.bf16.mxu0 0
      %479 = vmatpush1.bf16.msra.mxu0 0
      %480 = vmatprep.subr.bf16.mxu0 0
      %481 = vmatpush1.bf16.msra.mxu0 0
      %482 = vmatprep.subr.bf16.mxu0 0
      %483 = vmatpush1.bf16.msra.mxu0 0
      %484 = vmatprep.subr.bf16.mxu0 0
      %485 = vmatpush1.bf16.msra.mxu0 0
      %486 = vmatprep.subr.bf16.mxu0 0
      %487 = vmatpush1.bf16.msra.mxu0 0
      %488 = vmatprep.subr.bf16.mxu0 %v472
      %489 = vmatpush1.bf16.msra.mxu0 %v469
      %490 = vmatprep.subr.bf16.mxu0 0
      %491 = vmatpush2.bf16.msra.mxu0 0
      %492 = vmatprep.subr.bf16.mxu0 0
      %493 = vmatpush2.bf16.msra.mxu0 0
      %494 = vmatprep.subr.bf16.mxu0 0
      %495 = vmatpush2.bf16.msra.mxu0 0
      %496 = vmatprep.subr.bf16.mxu0 0
      %497 = vmatpush2.bf16.msra.mxu0 0
      %498 = vmatprep.subr.bf16.mxu0 0
      %499 = vmatpush2.bf16.msra.mxu0 0
      %500 = vmatprep.subr.bf16.mxu0 0
      %501 = vmatpush2.bf16.msra.mxu0 0
      %502 = vmatprep.subr.bf16.mxu0 0
      %503 = vmatpush2.bf16.msra.mxu0 0
      %504 = vmatprep.subr.bf16.mxu0 0
      %505 = vmatpush2.bf16.msra.mxu0 0
      %506 = vmatprep.mubr.bf16.mxu0 0
      %507 = vmatmul.mubr.bf16.gmra.mxu0 %v466
      %v508 = vpop.f32.mrf.mxu0
      %v509 = vadd.f32 %v463, %v508
      %v510 = vpop.f32.mrf.mxu0
      %v511 = vadd.f32 %v463, %v510
      %v512 = vpop.f32.mrf.mxu0
      %v513 = vpop.f32.mrf.mxu0
      %514 = vdwg.mxu0
      %v515 = vadd.f32 %v391, %v392
      %516 = vadd.xlane.f32.xlu0 %v515
      %v517 = vpop.xlane.xlu0 %516
      %v518 = vmul.f32 %v517, 0.00390625
      %v519 = vmul.f32 %v381, %v518
      %v520 = vsel %vm402, %v519, 0.0
      %v521 = vrot.slane %v520, 4
      %v522 = vadd.f32 %v520, %v521
      %v523 = vrot.slane %v522, 2
      %v524 = vadd.f32 %v522, %v523
      %v525 = vrot.slane %v524, 1
      %v526 = vadd.f32 %v524, %v525
      %v527 = vadd.f32 %v526, %v382
      %v528 = vmax.f32 %v527, 0.0
      %v529 = vlaneseq
      %v530 = vshrl.u32 %v529, 7
      %v531 = vsub.s32 0, %v530
      %v532 = vrot.slane %v528, %v531
      %v533 = vmul.f32 %v383, %v532
      %v534 = vsel %vm402, %v533, 0.0
      %535 = vadd.xlane.f32.xlu0 %v534
      %v536 = vpop.xlane.xlu0 %535
      %v537 = vadd.f32 %v536, %v384
      %539 = vset.pattern.permute.xlu0 0
      %540 = vperm.xlu0 %539, %v537
      %v541 = vpop.permute.xlu0 %540
      %v543 = vadd.f32 %v509, %v541
      %v544 = vadd.f32 %v511, %v541
      %v545 = vxor.u32 %v543, 2147483648
      %v546 = vxor.u32 %v544, 2147483648
      %v547 = vmul.f32 %v545, 1.442695
      %v548 = vpow.pop %v547
      %v549 = vmul.f32 %v546, 1.442695
      %v550 = vpow.pop %v549
      %v551 = vadd.f32 %v548, 1.0
      %v552 = vadd.f32 %v550, 1.0
      %v553 = vrcp.pop %v551
      %v554 = vmul.f32 1.0, %v553
      %v555 = vrcp.pop %v552
      %v556 = vmul.f32 1.0, %v555
      %v557 = vmul.f32 %v389, %v554
      %v558 = vmul.f32 %v390, %v556
      %v559 = vadd.f32 %v387, %v557
      %v560 = vadd.f32 %v388, %v558
      %s561 = scalar_lea.vmem %s2, 4
      %v562 = vld [vmem:[%s561] sm:$0xf]
      %v563 = vpack.c.bf16 %v559, %v559
      %v564 = vpack.c.bf16 %v560, %v560
      %s565 = scalar_lea.vmem %s3, 8
      %v566 = vld [vmem:[%s565] sm:$0xff]
      %568 = vset.pattern.permute.xlu0 0
      %569 = vperm.xlu0 %568, %v566
      %v570 = vpop.permute.xlu0 %569
      %v573 = vsel %vm402, %v562, 0
      %v576 = vsel %vm406, %v563, 0
      %v579 = vsel %vm406, %v564, 0
      %581 = vmatprep.subr.bf16.mxu0 0
      %582 = vmatpush1.bf16.msra.mxu0 0
      %583 = vmatprep.subr.bf16.mxu0 0
      %584 = vmatpush1.bf16.msra.mxu0 0
      %585 = vmatprep.subr.bf16.mxu0 0
      %586 = vmatpush1.bf16.msra.mxu0 0
      %587 = vmatprep.subr.bf16.mxu0 0
      %588 = vmatpush1.bf16.msra.mxu0 0
      %589 = vmatprep.subr.bf16.mxu0 0
      %590 = vmatpush1.bf16.msra.mxu0 0
      %591 = vmatprep.subr.bf16.mxu0 0
      %592 = vmatpush1.bf16.msra.mxu0 0
      %593 = vmatprep.subr.bf16.mxu0 0
      %594 = vmatpush1.bf16.msra.mxu0 0
      %595 = vmatprep.subr.bf16.mxu0 %v579
      %596 = vmatpush1.bf16.msra.mxu0 %v576
      %597 = vmatprep.subr.bf16.mxu0 0
      %598 = vmatpush2.bf16.msra.mxu0 0
      %599 = vmatprep.subr.bf16.mxu0 0
      %600 = vmatpush2.bf16.msra.mxu0 0
      %601 = vmatprep.subr.bf16.mxu0 0
      %602 = vmatpush2.bf16.msra.mxu0 0
      %603 = vmatprep.subr.bf16.mxu0 0
      %604 = vmatpush2.bf16.msra.mxu0 0
      %605 = vmatprep.subr.bf16.mxu0 0
      %606 = vmatpush2.bf16.msra.mxu0 0
      %607 = vmatprep.subr.bf16.mxu0 0
      %608 = vmatpush2.bf16.msra.mxu0 0
      %609 = vmatprep.subr.bf16.mxu0 0
      %610 = vmatpush2.bf16.msra.mxu0 0
      %611 = vmatprep.subr.bf16.mxu0 0
      %612 = vmatpush2.bf16.msra.mxu0 0
      %613 = vmatprep.mubr.bf16.mxu0 0
      %614 = vmatmul.mubr.bf16.gmra.mxu0 %v573
      %v615 = vpop.f32.mrf.mxu0
      %v616 = vadd.f32 %v570, %v615
      %v617 = vpop.f32.mrf.mxu0
      %v618 = vadd.f32 %v570, %v617
      %v619 = vpop.f32.mrf.mxu0
      %v620 = vpop.f32.mrf.mxu0
      %621 = vdwg.mxu0
      %v622 = vmax.f32 %v616, 0.0
      %v623 = vmax.f32 %v618, 0.0
      %s624 = scalar_lea.vmem %s4, 4
      %v625 = vld [vmem:[%s624] sm:$0xf]
      %v626 = vpack.c.bf16 %v622, %v622
      %v627 = vpack.c.bf16 %v623, %v623
      %s628 = scalar_lea.vmem %s5, 8
      %v629 = vld [vmem:[%s628] sm:$0xff]
      %631 = vset.pattern.permute.xlu0 0
      %632 = vperm.xlu0 %631, %v629
      %v633 = vpop.permute.xlu0 %632
      %v636 = vsel %vm402, %v625, 0
      %v639 = vsel %vm406, %v626, 0
      %v642 = vsel %vm406, %v627, 0
      %644 = vmatprep.subr.bf16.mxu0 0
      %645 = vmatpush1.bf16.msra.mxu0 0
      %646 = vmatprep.subr.bf16.mxu0 0
      %647 = vmatpush1.bf16.msra.mxu0 0
      %648 = vmatprep.subr.bf16.mxu0 0
      %649 = vmatpush1.bf16.msra.mxu0 0
      %650 = vmatprep.subr.bf16.mxu0 0
      %651 = vmatpush1.bf16.msra.mxu0 0
      %652 = vmatprep.subr.bf16.mxu0 0
      %653 = vmatpush1.bf16.msra.mxu0 0
      %654 = vmatprep.subr.bf16.mxu0 0
      %655 = vmatpush1.bf16.msra.mxu0 0
      %656 = vmatprep.subr.bf16.mxu0 0
      %657 = vmatpush1.bf16.msra.mxu0 0
      %658 = vmatprep.subr.bf16.mxu0 %v642
      %659 = vmatpush1.bf16.msra.mxu0 %v639
      %660 = vmatprep.subr.bf16.mxu0 0
      %661 = vmatpush2.bf16.msra.mxu0 0
      %662 = vmatprep.subr.bf16.mxu0 0
      %663 = vmatpush2.bf16.msra.mxu0 0
      %664 = vmatprep.subr.bf16.mxu0 0
      %665 = vmatpush2.bf16.msra.mxu0 0
      %666 = vmatprep.subr.bf16.mxu0 0
      %667 = vmatpush2.bf16.msra.mxu0 0
      %668 = vmatprep.subr.bf16.mxu0 0
      %669 = vmatpush2.bf16.msra.mxu0 0
      %670 = vmatprep.subr.bf16.mxu0 0
      %671 = vmatpush2.bf16.msra.mxu0 0
      %672 = vmatprep.subr.bf16.mxu0 0
      %673 = vmatpush2.bf16.msra.mxu0 0
      %674 = vmatprep.subr.bf16.mxu0 0
      %675 = vmatpush2.bf16.msra.mxu0 0
      %676 = vmatprep.mubr.bf16.mxu0 0
      %677 = vmatmul.mubr.bf16.gmra.mxu0 %v636
      %v678 = vpop.f32.mrf.mxu0
      %v679 = vadd.f32 %v633, %v678
      %v680 = vpop.f32.mrf.mxu0
      %v681 = vadd.f32 %v633, %v680
      %v682 = vpop.f32.mrf.mxu0
      %v683 = vpop.f32.mrf.mxu0
      %684 = vdwg.mxu0
      %v685 = vadd.f32 %v559, %v560
      %686 = vadd.xlane.f32.xlu0 %v685
      %v687 = vpop.xlane.xlu0 %686
      %v688 = vmul.f32 %v687, 0.00390625
      %v689 = vmul.f32 %v381, %v688
      %v690 = vsel %vm402, %v689, 0.0
      %v691 = vrot.slane %v690, 4
      %v692 = vadd.f32 %v690, %v691
      %v693 = vrot.slane %v692, 2
      %v694 = vadd.f32 %v692, %v693
      %v695 = vrot.slane %v694, 1
      %v696 = vadd.f32 %v694, %v695
      %v697 = vadd.f32 %v696, %v382
      %v698 = vmax.f32 %v697, 0.0
      %v699 = vlaneseq
      %v700 = vshrl.u32 %v699, 7
      %v701 = vsub.s32 0, %v700
      %v702 = vrot.slane %v698, %v701
      %v703 = vmul.f32 %v383, %v702
      %v704 = vsel %vm402, %v703, 0.0
      %705 = vadd.xlane.f32.xlu0 %v704
      %v706 = vpop.xlane.xlu0 %705
      %v707 = vadd.f32 %v706, %v384
      %709 = vset.pattern.permute.xlu0 0
      %710 = vperm.xlu0 %709, %v707
      %v711 = vpop.permute.xlu0 %710
      %v713 = vadd.f32 %v679, %v711
      %v714 = vadd.f32 %v681, %v711
      %v715 = vxor.u32 %v713, 2147483648
      %v716 = vxor.u32 %v714, 2147483648
      %v717 = vmul.f32 %v715, 1.442695
      %v718 = vpow.pop %v717
      %v719 = vmul.f32 %v716, 1.442695
      %v720 = vpow.pop %v719
      %v721 = vadd.f32 %v718, 1.0
      %v722 = vadd.f32 %v720, 1.0
      %v723 = vrcp.pop %v721
      %v724 = vmul.f32 1.0, %v723
      %v725 = vrcp.pop %v722
      %v726 = vmul.f32 1.0, %v725
      %v727 = vmul.f32 %v389, %v724
      %v728 = vmul.f32 %v390, %v726
      %v729 = vadd.f32 %v387, %v727
      %v730 = vadd.f32 %v388, %v728
      %731 = vst [vmem:[%s379] sm:$0xff] %v729
      %732 = vst [vmem:[%s379 + $0x8] sm:$0xff] %v730
      %p733 = scmp.lt.s32.totalorder %s21, 1
      %s734 = scalar_select %p733, %s21, 1
      %s735 = smul.addr %s734, 2
      %s736 = smul.addr %s735, 8
      %s737 = scalar_lea.vmem %s10, %s736
      // Predicated region
      $region61: #{iaff_forward.1} parent=59 // pred_check
        %p738 = pneg %p259
      $region62: #{iaff_forward.1} parent=59 // pred_check_branch
        %740 = sbr.rel (%p738) target = $region64
      $region63: #{iaff_forward.1} parent=59 // pred_region
        _
      $region64: #{iaff_forward.1} parent=59 // pred_fallthru
        _
    $region60: #{iaff_forward.1} parent=5 // pred_fallthru
      _
    %p741 = scmp.le.s32.totalorder 2, %s16
    // Predicated region
    $region65: #{iaff_forward.1} parent=5 // pred_check
      %p742 = pneg %p741
    $region66: #{iaff_forward.1} parent=5 // pred_check_branch
      %744 = sbr.rel (%p742) target = $region68
    $region67: #{iaff_forward.1} parent=5 // pred_region
      %s745 = ssub.s32 %s16, 2
      // Predicated region
      $region69: #{iaff_forward.1} parent=67 // pred_check
        %p746 = pneg %p265
      $region70: #{iaff_forward.1} parent=67 // pred_check_branch
        %748 = sbr.rel (%p746) target = $region72
      $region71: #{iaff_forward.1} parent=67 // pred_region
        %p749 = scmp.lt.s32.totalorder %s22, 1
        %s750 = scalar_select %p749, %s22, 1
        %s751 = smul.addr %s750, 2
        %s752 = smul.addr %s751, 8
        %s753 = scalar_lea.vmem %s10, %s752
      $region72: #{iaff_forward.1} parent=67 // pred_fallthru
        _
    $region68: #{iaff_forward.1} parent=5 // pred_fallthru
      _
  $region6: #{iaff_forward.1} parent=0 // loop_footer
    %s20 = sadd.s32 1, %s16
  $region7: #{iaff_forward.1} parent=0 // loop_footer_branch
    %15 = sbr.rel target = $region3
  $region8: #{iaff_forward.1} parent=0 // loop_exit
    _

</llo_original>
